<compile_context>
chip_gen: v7x
topology: tpu7x:2x2x1
jax: 0.10.0
libtpu: 0.0.40
codegen_flags: <defaults>
</compile_context>

<pallas_src>
import functools

import jax
import jax.numpy as jnp
from jax.experimental import pallas as pl
from jax.experimental.pallas import tpu as pltpu

EPSILON = float(jnp.finfo(jnp.float32).eps)  # == torch.finfo(torch.float32).eps


def _make_kernel(n_layers, comp_p):
    def kernel(h_ref, x_ref, w1t_ref, w2t_ref, o_ref, num_ref):
        # h_ref   : (tb, comp_p)            x_ref : (tb, features)
        # w1t_ref : (L, comp_p, comp_p)     per-layer fc1.weight^T (zero-padded)
        # w2t_ref : (features, L * comp_p)  per-layer fc2.weight^T, concatenated on lanes
        # num_ref : (tb, L * comp_p)        VMEM scratch: all layers' numerators
        # All L numerators at once: one wide, lane-dense MXU matmul (h-independent).
        num_ref[...] = jnp.dot(x_ref[...], w2t_ref[...],
                               preferred_element_type=jnp.float32)
        h = h_ref[...]
        for i in range(n_layers):  # unrolled: static slices, LLO sees across layers
            denom = jnp.dot(h, w1t_ref[i], preferred_element_type=jnp.float32)
            denom = jnp.where(denom == 0.0, EPSILON, denom)
            numer = num_ref[:, i * comp_p:(i + 1) * comp_p]
            h = (numer / denom) * h
        o_ref[...] = h

    return kernel


def multi_fr_dnmf(h, x, w1_stack, w2_stack, *, block_b=None):
    """Forward of MultiFrDNMFNet.

    h        : (B, comp)            initial exposures / coefficients
    x        : (B, features)        data matrix V
    w1_stack : (L, comp, comp)      per-layer fc1.weight (PyTorch layout)
    w2_stack : (L, comp, features)  per-layer fc2.weight (PyTorch layout)
    """
    B, comp = h.shape
    _, features = x.shape
    L = w1_stack.shape[0]

    # Lane-dense padding of the component axis.
    comp_p = ((comp + 127) // 128) * 128

    if block_b is None:
        block_b = min(B, 256)
    block_b = min(block_b, B)
    if block_b != B:
        assert B % block_b == 0 and block_b % 8 == 0, (
            "block_b must divide B and be a multiple of 8")

    h32 = jnp.pad(h.astype(jnp.float32), ((0, 0), (0, comp_p - comp)))
    x32 = x.astype(jnp.float32)

    # fc(y) = y @ W^T : pre-transpose and zero-pad the weights outside the kernel.
    w1t = jnp.transpose(w1_stack.astype(jnp.float32), (0, 2, 1))          # (L, comp, comp)
    w1t = jnp.pad(w1t, ((0, 0), (0, comp_p - comp), (0, comp_p - comp)))  # (L, comp_p, comp_p)
    w2t = jnp.transpose(w2_stack.astype(jnp.float32), (0, 2, 1))          # (L, features, comp)
    w2t = jnp.pad(w2t, ((0, 0), (0, 0), (0, comp_p - comp)))              # (L, features, comp_p)
    w2t_cat = jnp.transpose(w2t, (1, 0, 2)).reshape(features, L * comp_p)

    grid = (B // block_b,)
    out = pl.pallas_call(
        _make_kernel(L, comp_p),
        out_shape=jax.ShapeDtypeStruct((B, comp_p), jnp.float32),
        grid_spec=pltpu.PrefetchScalarGridSpec(
            num_scalar_prefetch=0,
            grid=grid,
            in_specs=[
                pl.BlockSpec((block_b, comp_p), lambda i: (i, 0)),
                pl.BlockSpec((block_b, features), lambda i: (i, 0)),
                # TODO(synk): for very large L/features (v7x 64 MiB VMEM), stream
                # per-layer weights via memory_space=pl.ANY + make_async_copy instead
                # of keeping the full stacks resident.
                pl.BlockSpec((L, comp_p, comp_p), lambda i: (0, 0, 0)),
                pl.BlockSpec((features, L * comp_p), lambda i: (0, 0)),
            ],
            out_specs=pl.BlockSpec((block_b, comp_p), lambda i: (i, 0)),
            scratch_shapes=[pltpu.VMEM((block_b, L * comp_p), jnp.float32)],
        ),
        compiler_params=pltpu.CompilerParams(
            dimension_semantics=("parallel",)),
    )(h32, x32, w1t, w2t_cat)
    return out[:, :comp]


def _reference(h, x, w1_stack, w2_stack):
    """Pure-JAX reference mirroring the PyTorch forward exactly."""
    h = h.astype(jnp.float32)
    for i in range(w1_stack.shape[0]):
        denom = h @ w1_stack[i].T          # fc1(h)
        numer = x @ w2_stack[i].T          # fc2(x)
        denom = jnp.where(denom == 0.0, EPSILON, denom)
        h = (numer / denom) * h
    return h


if __name__ == "__main__":
    # Small, deterministic setup: n_layers=3, comp=4, features=32, batch=128.
    n_layers, comp, features = 3, 4, 32
    batch = 128

    key = jax.random.PRNGKey(0)
    k_h, k_x, k_w1, k_w2 = jax.random.split(key, 4)

    # Non-negative inputs / weights, as expected for NMF multiplicative updates.
    h0 = jax.random.uniform(k_h, (batch, comp), jnp.float32, minval=0.1, maxval=1.0)
    x = jax.random.uniform(k_x, (batch, features), jnp.float32, minval=0.1, maxval=1.0)
    w1_stack = jax.random.uniform(k_w1, (n_layers, comp, comp), jnp.float32,
                                  minval=0.05, maxval=1.0)
    w2_stack = jax.random.uniform(k_w2, (n_layers, comp, features), jnp.float32,
                                  minval=0.05, maxval=1.0)

    # block_b=64 -> 2 grid blocks so both v7x TensorCores are used.
    run = jax.jit(functools.partial(multi_fr_dnmf, block_b=64))
    out = jax.block_until_ready(run(h0, x, w1_stack, w2_stack))

    ref = _reference(h0, x, w1_stack, w2_stack)
    assert out.shape == (batch, comp)
    assert jnp.allclose(out, ref, rtol=1e-4, atol=1e-5), "mismatch vs reference"

    print("KERNEL_OK")
</pallas_src>

<mosaic_0001>
module attributes {stable_mosaic.version = 11 : i64} {
  func.func @kernel(%arg0: i32, %arg1: memref<64x128xf32, #tpu.memory_space<vmem>>, %arg2: memref<64x32xf32, #tpu.memory_space<vmem>>, %arg3: memref<3x128x128xf32, #tpu.memory_space<vmem>>, %arg4: memref<32x384xf32, #tpu.memory_space<vmem>>, %arg5: memref<64x128xf32, #tpu.memory_space<vmem>>, %arg6: memref<64x384xf32, #tpu.memory_space<vmem>>) attributes {dimension_semantics = [#tpu.dimension_semantics<parallel>], iteration_bounds = array<i64: 2>, scalar_prefetch = 0 : i64, scratch_operands = 1 : i64, tpu.core_type = #tpu.core_type<tc>, window_params = [{transform_indices = @transform_0, window_bounds = array<i64: 64, 128>}, {transform_indices = @transform_1, window_bounds = array<i64: 64, 32>}, {pipeline_mode = #tpu.pipeline_mode<synchronous>, transform_indices = @transform_2, window_bounds = array<i64: 3, 128, 128>}, {pipeline_mode = #tpu.pipeline_mode<synchronous>, transform_indices = @transform_3, window_bounds = array<i64: 32, 384>}, {transform_indices = @transform_4, window_bounds = array<i64: 64, 128>}]} {
    %c0 = arith.constant 0 : index
    %c0_0 = arith.constant 0 : index
    %0 = vector.load %arg2[%c0, %c0_0] : memref<64x32xf32, #tpu.memory_space<vmem>>, vector<64x32xf32>
    %c0_1 = arith.constant 0 : index
    %c0_2 = arith.constant 0 : index
    %1 = vector.load %arg4[%c0_1, %c0_2] : memref<32x384xf32, #tpu.memory_space<vmem>>, vector<32x384xf32>
    %cst = arith.constant dense<0.000000e+00> : vector<64x384xf32>
    %2 = tpu.matmul %0, %1, %cst {dimension_numbers = #tpu.dot_dimension_numbers<[1], [0], [0], [1], [0, 0, 1, 1], [], []>} : vector<64x32xf32>, vector<32x384xf32>, vector<64x384xf32> -> vector<64x384xf32>
    %c0_3 = arith.constant 0 : index
    %c0_4 = arith.constant 0 : index
    %3 = vector.load %arg6[%c0_3, %c0_4] : memref<64x384xf32, #tpu.memory_space<vmem>>, vector<64x384xf32>
    tpu.vector_store %arg6[%c0_3, %c0_4], %2 {strides = array<i32>} : memref<64x384xf32, #tpu.memory_space<vmem>>, vector<64x384xf32>,
    %c0_5 = arith.constant 0 : index
    %c0_6 = arith.constant 0 : index
    %4 = vector.load %arg1[%c0_5, %c0_6] : memref<64x128xf32, #tpu.memory_space<vmem>>, vector<64x128xf32>
    %c0_7 = arith.constant 0 : index
    %c0_8 = arith.constant 0 : index
    %c0_9 = arith.constant 0 : index
    %5 = vector.load %arg3[%c0_7, %c0_8, %c0_9] : memref<3x128x128xf32, #tpu.memory_space<vmem>>, vector<1x128x128xf32>
    %6 = vector.shape_cast %5 : vector<1x128x128xf32> to vector<128x128xf32>
    %cst_10 = arith.constant dense<0.000000e+00> : vector<64x128xf32>
    %7 = tpu.matmul %4, %6, %cst_10 {dimension_numbers = #tpu.dot_dimension_numbers<[1], [0], [0], [1], [0, 0, 1, 1], [], []>} : vector<64x128xf32>, vector<128x128xf32>, vector<64x128xf32> -> vector<64x128xf32>
    %cst_11 = arith.constant 0.000000e+00 : f32
    %8 = vector.broadcast %cst_11 : f32 to vector<64x128xf32>
    %9 = arith.cmpf oeq, %7, %8 : vector<64x128xf32>
    %cst_12 = arith.constant 1.1920929E-7 : f32
    %10 = vector.broadcast %cst_12 : f32 to vector<64x128xf32>
    %11 = arith.select %9, %10, %7 : vector<64x128xi1>, vector<64x128xf32>
    %c0_13 = arith.constant 0 : index
    %c0_14 = arith.constant 0 : index
    %12 = vector.load %arg6[%c0_13, %c0_14] : memref<64x384xf32, #tpu.memory_space<vmem>>, vector<64x128xf32>
    %13 = arith.divf %12, %11 : vector<64x128xf32>
    %14 = arith.mulf %13, %4 : vector<64x128xf32>
    %c1 = arith.constant 1 : index
    %c0_15 = arith.constant 0 : index
    %c0_16 = arith.constant 0 : index
    %15 = vector.load %arg3[%c1, %c0_15, %c0_16] : memref<3x128x128xf32, #tpu.memory_space<vmem>>, vector<1x128x128xf32>
    %16 = vector.shape_cast %15 : vector<1x128x128xf32> to vector<128x128xf32>
    %cst_17 = arith.constant dense<0.000000e+00> : vector<64x128xf32>
    %17 = tpu.matmul %14, %16, %cst_17 {dimension_numbers = #tpu.dot_dimension_numbers<[1], [0], [0], [1], [0, 0, 1, 1], [], []>} : vector<64x128xf32>, vector<128x128xf32>, vector<64x128xf32> -> vector<64x128xf32>
    %cst_18 = arith.constant 0.000000e+00 : f32
    %18 = vector.broadcast %cst_18 : f32 to vector<64x128xf32>
    %19 = arith.cmpf oeq, %17, %18 : vector<64x128xf32>
    %cst_19 = arith.constant 1.1920929E-7 : f32
    %20 = vector.broadcast %cst_19 : f32 to vector<64x128xf32>
    %21 = arith.select %19, %20, %17 : vector<64x128xi1>, vector<64x128xf32>
    %c0_20 = arith.constant 0 : index
    %c128 = arith.constant 128 : index
    %22 = vector.load %arg6[%c0_20, %c128] : memref<64x384xf32, #tpu.memory_space<vmem>>, vector<64x128xf32>
    %23 = arith.divf %22, %21 : vector<64x128xf32>
    %24 = arith.mulf %23, %14 : vector<64x128xf32>
    %c2 = arith.constant 2 : index
    %c0_21 = arith.constant 0 : index
    %c0_22 = arith.constant 0 : index
    %25 = vector.load %arg3[%c2, %c0_21, %c0_22] : memref<3x128x128xf32, #tpu.memory_space<vmem>>, vector<1x128x128xf32>
    %26 = vector.shape_cast %25 : vector<1x128x128xf32> to vector<128x128xf32>
    %cst_23 = arith.constant dense<0.000000e+00> : vector<64x128xf32>
    %27 = tpu.matmul %24, %26, %cst_23 {dimension_numbers = #tpu.dot_dimension_numbers<[1], [0], [0], [1], [0, 0, 1, 1], [], []>} : vector<64x128xf32>, vector<128x128xf32>, vector<64x128xf32> -> vector<64x128xf32>
    %cst_24 = arith.constant 0.000000e+00 : f32
    %28 = vector.broadcast %cst_24 : f32 to vector<64x128xf32>
    %29 = arith.cmpf oeq, %27, %28 : vector<64x128xf32>
    %cst_25 = arith.constant 1.1920929E-7 : f32
    %30 = vector.broadcast %cst_25 : f32 to vector<64x128xf32>
    %31 = arith.select %29, %30, %27 : vector<64x128xi1>, vector<64x128xf32>
    %c0_26 = arith.constant 0 : index
    %c256 = arith.constant 256 : index
    %32 = vector.load %arg6[%c0_26, %c256] : memref<64x384xf32, #tpu.memory_space<vmem>>, vector<64x128xf32>
    %33 = arith.divf %32, %31 : vector<64x128xf32>
    %34 = arith.mulf %33, %24 : vector<64x128xf32>
    %c0_27 = arith.constant 0 : index
    %c0_28 = arith.constant 0 : index
    %35 = vector.load %arg5[%c0_27, %c0_28] : memref<64x128xf32, #tpu.memory_space<vmem>>, vector<64x128xf32>
    tpu.vector_store %arg5[%c0_27, %c0_28], %34 {strides = array<i32>} : memref<64x128xf32, #tpu.memory_space<vmem>>, vector<64x128xf32>,
    return
  }
  func.func @transform_0(%arg0: i32) -> (i32, i32) {
    %c0_i32 = arith.constant 0 : i32
    %c0_i32_0 = arith.constant 0 : i32
    return %arg0, %c0_i32 : i32, i32
  }
  func.func @transform_1(%arg0: i32) -> (i32, i32) {
    %c0_i32 = arith.constant 0 : i32
    %c0_i32_0 = arith.constant 0 : i32
    return %arg0, %c0_i32 : i32, i32
  }
  func.func @transform_2(%arg0: i32) -> (i32, i32, i32) {
    %c0_i32 = arith.constant 0 : i32
    %c0_i32_0 = arith.constant 0 : i32
    %c0_i32_1 = arith.constant 0 : i32
    %c0_i32_2 = arith.constant 0 : i32
    return %c0_i32, %c0_i32_0, %c0_i32_1 : i32, i32, i32
  }
  func.func @transform_3(%arg0: i32) -> (i32, i32) {
    %c0_i32 = arith.constant 0 : i32
    %c0_i32_0 = arith.constant 0 : i32
    %c0_i32_1 = arith.constant 0 : i32
    return %c0_i32, %c0_i32_0 : i32, i32
  }
  func.func @transform_4(%arg0: i32) -> (i32, i32) {
    %c0_i32 = arith.constant 0 : i32
    %c0_i32_0 = arith.constant 0 : i32
    return %arg0, %c0_i32 : i32, i32
  }
}

</mosaic_0001>

<llo_original>
// kernel: multi_fr_dnmf.1
$region0: #{multi_fr_dnmf.1}
  #allocation0 [shape = 'u32[]', space=smem, size = 0x4, offset = 0x4, fixed_abs, tag = 'smem constant byte address 0x4 - core index']
  #allocation1 [shape = 'u32[144,128]{1,0:T(1,128)}', space=vmem, size = 0x12000, scoped, tag = 'internal scratch']
  #allocation2 [shape = 'f32[64,384]{1,0:T(8,128)}', space=vmem, size = 0x18000, scoped, tag = 'scratch operand']
  %s0 = inlined_call_operand.vmem [shape: f32[128,128], index: 0, kind: input, shape index: {}]
  %s1 = inlined_call_operand.vmem [shape: f32[128,32], index: 1, kind: input, shape index: {}]
  %s2 = inlined_call_operand.vmem [shape: f32[3,128,128], index: 2, kind: input, shape index: {}]
  %s3 = inlined_call_operand.vmem [shape: f32[32,384], index: 3, kind: input, shape index: {}]
  %s4 = inlined_call_operand.vmem [shape: f32[128,128], index: 4, kind: output, shape index: {}]
  %s5 = sld [smem:[#allocation0]]
  $region49: #{multi_fr_dnmf.1} parent=0
    _
  %s7 = ssub.s32 1, %s5
  %s8 = scalar_select 0, %s7, %s5
  loop: start=0, step=1, limit=4
  $region2: #{multi_fr_dnmf.1} parent=0 // loop_pre_header
    _
  $region3: #{multi_fr_dnmf.1} parent=0 // loop_header
    %s10 = sphi 0, %s14
    %p11 = scmp.ge.s32.totalorder %s10, 4
    %s20 = sphi 0, %s22
    %s23 = sphi 0, %s20
    %s24 = sphi 0, %s23
    %s40 = sphi 0, %s24
    %s46 = sphi 0, %s48
    %s49 = sphi 0, %s46
    %s50 = sphi 0, %s49
    %s66 = sphi 0, %s50
    %s70 = sphi 0, %s70
    %s72 = sphi 0, %s70
    %s73 = sphi 0, %s72
    %s87 = sphi 0, %s73
    %s91 = sphi 0, %s91
    %s93 = sphi 0, %s91
    %s94 = sphi 0, %s93
    %s108 = sphi 0, %s94
    %s114 = sphi 0, %s116
    %s117 = sphi 0, %s114
    %s118 = sphi 0, %s117
    %s134 = sphi 0, %s118
  $region4: #{multi_fr_dnmf.1} parent=0 // loop_header_branch
    %13 = sbr.rel (%p11) target = $region8
  $region5: #{multi_fr_dnmf.1} parent=0 // loop_body
    %s15 = ssub.s32 %s10, 1
    %s16 = ssub.s32 %s10, 2
    %s17 = sadd.s32 %s10, 1
    %s18 = ssub.s32 %s10, %s17
    %p19 = scmp.eq.s32.totalorder %s18, 0
    %s21 = sadd.s32 %s20, 1
    %s22 = scalar_select %p19, %s20, %s21
    %p25 = pneg %p19
    %p26 = scmp.eq.s32.totalorder %s10, 1
    %p27 = por %p25, %p26
    %p28 = scmp.ne.s32.totalorder %s20, %s23
    %p29 = scmp.eq.s32.totalorder %s10, 0
    %p30 = por %p28, %p29
    %p31 = scmp.ne.s32.totalorder %s20, %s23
    %p32 = scmp.eq.s32.totalorder %s15, 1
    %p33 = por %p31, %p32
    %p34 = scmp.ne.s32.totalorder %s23, %s24
    %p35 = scmp.eq.s32.totalorder %s15, 0
    %p36 = por %p34, %p35
    %p37 = scmp.ne.s32.totalorder %s23, %s24
    %p38 = scmp.eq.s32.totalorder %s16, 1
    %p39 = por %p37, %p38
    %p41 = scmp.ne.s32.totalorder %s24, %s40
    %p42 = scmp.eq.s32.totalorder %s16, 0
    %p43 = por %p41, %p42
    %s44 = ssub.s32 %s10, %s17
    %p45 = scmp.eq.s32.totalorder %s44, 0
    %s47 = sadd.s32 %s46, 1
    %s48 = scalar_select %p45, %s46, %s47
    %p51 = pneg %p45
    %p52 = scmp.eq.s32.totalorder %s10, 1
    %p53 = por %p51, %p52
    %p54 = scmp.ne.s32.totalorder %s46, %s49
    %p55 = scmp.eq.s32.totalorder %s10, 0
    %p56 = por %p54, %p55
    %p57 = scmp.ne.s32.totalorder %s46, %s49
    %p58 = scmp.eq.s32.totalorder %s15, 1
    %p59 = por %p57, %p58
    %p60 = scmp.ne.s32.totalorder %s49, %s50
    %p61 = scmp.eq.s32.totalorder %s15, 0
    %p62 = por %p60, %p61
    %p63 = scmp.ne.s32.totalorder %s49, %s50
    %p64 = scmp.eq.s32.totalorder %s16, 1
    %p65 = por %p63, %p64
    %p67 = scmp.ne.s32.totalorder %s50, %s66
    %p68 = scmp.eq.s32.totalorder %s16, 0
    %p69 = por %p67, %p68
    %s71 = sadd.s32 %s70, 1
    %p74 = scmp.eq.s32.totalorder %s10, 1
    %p75 = scmp.ne.s32.totalorder %s70, %s72
    %p76 = scmp.eq.s32.totalorder %s10, 0
    %p77 = por %p75, %p76
    %p78 = scmp.ne.s32.totalorder %s70, %s72
    %p79 = scmp.eq.s32.totalorder %s15, 1
    %p80 = por %p78, %p79
    %p81 = scmp.ne.s32.totalorder %s72, %s73
    %p82 = scmp.eq.s32.totalorder %s15, 0
    %p83 = por %p81, %p82
    %p84 = scmp.ne.s32.totalorder %s72, %s73
    %p85 = scmp.eq.s32.totalorder %s16, 1
    %p86 = por %p84, %p85
    %p88 = scmp.ne.s32.totalorder %s73, %s87
    %p89 = scmp.eq.s32.totalorder %s16, 0
    %p90 = por %p88, %p89
    %s92 = sadd.s32 %s91, 1
    %p95 = scmp.eq.s32.totalorder %s10, 1
    %p96 = scmp.ne.s32.totalorder %s91, %s93
    %p97 = scmp.eq.s32.totalorder %s10, 0
    %p98 = por %p96, %p97
    %p99 = scmp.ne.s32.totalorder %s91, %s93
    %p100 = scmp.eq.s32.totalorder %s15, 1
    %p101 = por %p99, %p100
    %p102 = scmp.ne.s32.totalorder %s93, %s94
    %p103 = scmp.eq.s32.totalorder %s15, 0
    %p104 = por %p102, %p103
    %p105 = scmp.ne.s32.totalorder %s93, %s94
    %p106 = scmp.eq.s32.totalorder %s16, 1
    %p107 = por %p105, %p106
    %p109 = scmp.ne.s32.totalorder %s94, %s108
    %p110 = scmp.eq.s32.totalorder %s16, 0
    %p111 = por %p109, %p110
    %s112 = ssub.s32 %s10, %s17
    %p113 = scmp.eq.s32.totalorder %s112, 0
    %s115 = sadd.s32 %s114, 1
    %s116 = scalar_select %p113, %s114, %s115
    %p119 = pneg %p113
    %p120 = scmp.eq.s32.totalorder %s10, 1
    %p121 = por %p119, %p120
    %p122 = scmp.ne.s32.totalorder %s114, %s117
    %p123 = scmp.eq.s32.totalorder %s10, 0
    %p124 = por %p122, %p123
    %p125 = scmp.ne.s32.totalorder %s114, %s117
    %p126 = scmp.eq.s32.totalorder %s15, 1
    %p127 = por %p125, %p126
    %p128 = scmp.ne.s32.totalorder %s117, %s118
    %p129 = scmp.eq.s32.totalorder %s15, 0
    %p130 = por %p128, %p129
    %p131 = scmp.ne.s32.totalorder %s117, %s118
    %p132 = scmp.eq.s32.totalorder %s16, 1
    %p133 = por %p131, %p132
    %p135 = scmp.ne.s32.totalorder %s118, %s134
    %p136 = scmp.eq.s32.totalorder %s16, 0
    %p137 = por %p135, %p136
    %p138 = scmp.le.s32.totalorder 1, %s10
    %p139 = scmp.lt.s32.totalorder %s10, 3
    %p140 = pnand %p138, %p139
    %p141 = pneg %p140
    // Predicated region
    $region9: #{multi_fr_dnmf.1} parent=5 // pred_check
      _
    $region10: #{multi_fr_dnmf.1} parent=5 // pred_check_branch
      %143 = sbr.rel (%p140) target = $region12
    $region11: #{multi_fr_dnmf.1} parent=5 // pred_region
      %s144 = ssub.s32 %s10, 1
      // Predicated region
      $region13: #{multi_fr_dnmf.1} parent=11 // pred_check
        %p145 = pneg %p83
      $region14: #{multi_fr_dnmf.1} parent=11 // pred_check_branch
        %147 = sbr.rel (%p145) target = $region16
      $region15: #{multi_fr_dnmf.1} parent=11 // pred_region
        _
      $region16: #{multi_fr_dnmf.1} parent=11 // pred_fallthru
        _
      // Predicated region
      $region17: #{multi_fr_dnmf.1} parent=11 // pred_check
        %p148 = pneg %p104
      $region18: #{multi_fr_dnmf.1} parent=11 // pred_check_branch
        %150 = sbr.rel (%p148) target = $region20
      $region19: #{multi_fr_dnmf.1} parent=11 // pred_region
        _
      $region20: #{multi_fr_dnmf.1} parent=11 // pred_fallthru
        _
    $region12: #{multi_fr_dnmf.1} parent=5 // pred_fallthru
      _
    %p151 = scmp.lt.s32.totalorder %s10, 2
    // Predicated region
    $region21: #{multi_fr_dnmf.1} parent=5 // pred_check
      %p152 = pneg %p151
    $region22: #{multi_fr_dnmf.1} parent=5 // pred_check_branch
      %154 = sbr.rel (%p152) target = $region24
    $region23: #{multi_fr_dnmf.1} parent=5 // pred_region
      // Predicated region
      $region25: #{multi_fr_dnmf.1} parent=23 // pred_check
        %p155 = pneg %p30
      $region26: #{multi_fr_dnmf.1} parent=23 // pred_check_branch
        %157 = sbr.rel (%p155) target = $region28
      $region27: #{multi_fr_dnmf.1} parent=23 // pred_region
        %s158 = smul.u32 8, %s10
        %p159 = scmp.lt.s32.totalorder %s158, 15
        %s160 = scalar_select %p159, %s158, 15
        %s161 = smul.addr %s160, 8
        %s162 = scalar_lea.vmem %s0, %s161
        %s163 = smul.u32 8, %s10
      $region28: #{multi_fr_dnmf.1} parent=23 // pred_fallthru
        _
      // Predicated region
      $region29: #{multi_fr_dnmf.1} parent=23 // pred_check
        %p164 = pneg %p56
      $region30: #{multi_fr_dnmf.1} parent=23 // pred_check_branch
        %166 = sbr.rel (%p164) target = $region32
      $region31: #{multi_fr_dnmf.1} parent=23 // pred_region
        %s167 = smul.u32 8, %s10
        %p168 = scmp.lt.s32.totalorder %s167, 15
        %s169 = scalar_select %p168, %s167, 15
        %s170 = smul.addr %s169, 8
        %s171 = scalar_lea.vmem %s1, %s170
        %s172 = smul.u32 8, %s10
      $region32: #{multi_fr_dnmf.1} parent=23 // pred_fallthru
        _
    $region24: #{multi_fr_dnmf.1} parent=5 // pred_fallthru
      _
    %p173 = scmp.le.s32.totalorder 1, %s10
    %p174 = scmp.lt.s32.totalorder %s10, 3
    %p175 = pnand %p173, %p174
    %p176 = pneg %p175
    // Predicated region
    $region33: #{multi_fr_dnmf.1} parent=5 // pred_check
      _
    $region34: #{multi_fr_dnmf.1} parent=5 // pred_check_branch
      %178 = sbr.rel (%p175) target = $region36
    $region35: #{multi_fr_dnmf.1} parent=5 // pred_region
      %s179 = ssub.s32 %s10, 1
      %s180 = smul.u32 8, %s15
      %p181 = scmp.lt.s32.totalorder %s180, 15
      %s182 = scalar_select %p181, %s180, 15
      %s183 = smul.addr %s182, 8
      %s184 = scalar_lea.vmem %s0, %s183
      %p185 = pneg %p36
      %p186 = pneg %p33
      %s187 = smul.u32 8, %s15
      %p188 = scmp.lt.s32.totalorder %s187, 15
      %s189 = scalar_select %p188, %s187, 15
      %s190 = smul.addr %s189, 8
      %s191 = scalar_lea.vmem %s1, %s190
      %p192 = pneg %p62
      %p193 = pneg %p59
      %p194 = pneg %p83
      %p195 = pneg %p80
      %p196 = pneg %p104
      %p197 = pneg %p101
      %p198 = pneg %p130
      %p199 = pneg %p127
      %s200 = smul.u32 8, %s15
      %p201 = scmp.lt.s32.totalorder %s200, 15
      %s202 = scalar_select %p201, %s200, 15
      %s203 = smul.addr %s202, 8
      %s204 = scalar_lea.vmem %s4, %s203
      %s205 = smul.u32 8, %s15
      %p206 = scmp.lt.s32.totalorder %s205, 15
      %s207 = scalar_select %p206, %s205, 15
      %s208 = smul.addr %s207, 8
      %s209 = scalar_lea.vmem %s0, %s208
      %s210 = smul.u32 8, %s15
      %s211 = smul.u32 8, %s15
      %p212 = scmp.lt.s32.totalorder %s211, 15
      %s213 = scalar_select %p212, %s211, 15
      %s214 = smul.addr %s213, 8
      %s215 = scalar_lea.vmem %s1, %s214
      %s216 = smul.u32 8, %s15
      %s217 = smul.u32 8, %s15
      %p218 = scmp.lt.s32.totalorder %s217, 15
      %s219 = scalar_select %p218, %s217, 15
      %s220 = smul.addr %s219, 8
      %s221 = scalar_lea.vmem %s4, %s220
      %s222 = smul.u32 8, %s15
      %v223 = vld [vmem:[%s215] sm:$0xff]
      %v224 = vld [vmem:[%s215 + $0x8] sm:$0xff]
      %v225 = vld [vmem:[%s215 + $0x10] sm:$0xff]
      %v226 = vld [vmem:[%s215 + $0x18] sm:$0xff]
      %v227 = vld [vmem:[%s215 + $0x20] sm:$0xff]
      %v228 = vld [vmem:[%s215 + $0x28] sm:$0xff]
      %v229 = vld [vmem:[%s215 + $0x30] sm:$0xff]
      %v230 = vld [vmem:[%s215 + $0x38] sm:$0xff]
      %v231 = vld [vmem:[%s3] sm:$0xff]
      %v232 = vld [vmem:[%s3 + $0x8] sm:$0xff]
      %v233 = vld [vmem:[%s3 + $0x10] sm:$0xff]
      %v234 = vld [vmem:[%s3 + $0x18] sm:$0xff]
      %v235 = vld [vmem:[%s3 + $0x20] sm:$0xff]
      %v236 = vld [vmem:[%s3 + $0x28] sm:$0xff]
      %v237 = vld [vmem:[%s3 + $0x30] sm:$0xff]
      %v238 = vld [vmem:[%s3 + $0x38] sm:$0xff]
      %v239 = vld [vmem:[%s3 + $0x40] sm:$0xff]
      %v240 = vld [vmem:[%s3 + $0x48] sm:$0xff]
      %v241 = vld [vmem:[%s3 + $0x50] sm:$0xff]
      %v242 = vld [vmem:[%s3 + $0x58] sm:$0xff]
      %vm243 = vcmask 261120
      %v245 = vsel %vm243, %v223, 0
      %v248 = vsel %vm243, %v224, 0
      %v251 = vsel %vm243, %v225, 0
      %v254 = vsel %vm243, %v226, 0
      %v257 = vsel %vm243, %v227, 0
      %v260 = vsel %vm243, %v228, 0
      %v263 = vsel %vm243, %v229, 0
      %v266 = vsel %vm243, %v230, 0
      %268 = vmatprep.subr.mxu0 %v232
      %269 = vmatpush1.msra.mxu0 %v231
      %270 = vmatprep.subr.mxu0 %v235
      %271 = vmatpush1.msra.mxu0 %v234
      %272 = vmatprep.subr.mxu0 %v238
      %273 = vmatpush1.msra.mxu0 %v237
      %274 = vmatprep.subr.mxu0 %v241
      %275 = vmatpush1.msra.mxu0 %v240
      %276 = vmatprep.subr.mxu0 0.0
      %277 = vmatpush1.msra.mxu0 0.0
      %278 = vmatprep.subr.mxu0 0.0
      %279 = vmatpush1.msra.mxu0 0.0
      %280 = vmatprep.subr.mxu0 0.0
      %281 = vmatpush1.msra.mxu0 0.0
      %282 = vmatprep.subr.mxu0 0.0
      %283 = vmatpush1.msra.mxu0 0.0
      %284 = vmatprep.subr.mxu0 0.0
      %285 = vmatpush1.msra.mxu0 0.0
      %286 = vmatprep.subr.mxu0 0.0
      %287 = vmatpush1.msra.mxu0 0.0
      %288 = vmatprep.subr.mxu0 0.0
      %289 = vmatpush1.msra.mxu0 0.0
      %290 = vmatprep.subr.mxu0 0.0
      %291 = vmatpush1.msra.mxu0 0.0
      %292 = vmatprep.subr.mxu0 0.0
      %293 = vmatpush1.msra.mxu0 0.0
      %294 = vmatprep.subr.mxu0 0.0
      %295 = vmatpush1.msra.mxu0 0.0
      %296 = vmatprep.subr.mxu0 0.0
      %297 = vmatpush1.msra.mxu0 0.0
      %298 = vmatprep.subr.mxu0 0.0
      %299 = vmatpush1.msra.mxu0 0.0
      %300 = vmatprep.subr.mxu0 0.0
      %301 = vmatpush1.msra.mxu0 0.0
      %302 = vmatprep.subr.mxu0 0.0
      %303 = vmatpush1.msra.mxu0 0.0
      %304 = vmatprep.subr.mxu0 0.0
      %305 = vmatpush1.msra.mxu0 0.0
      %306 = vmatprep.subr.mxu0 0.0
      %307 = vmatpush1.msra.mxu0 0.0
      %308 = vmatprep.subr.mxu0 0.0
      %309 = vmatpush1.msra.mxu0 0.0
      %310 = vmatprep.subr.mxu0 0.0
      %311 = vmatpush1.msra.mxu0 0.0
      %312 = vmatprep.subr.mxu0 0.0
      %313 = vmatpush1.msra.mxu0 0.0
      %314 = vmatprep.subr.mxu0 0.0
      %315 = vmatpush1.msra.mxu0 0.0
      %316 = vmatprep.subr.mxu0 0.0
      %317 = vmatpush1.msra.mxu0 0.0
      %318 = vmatprep.subr.mxu0 0.0
      %319 = vmatpush1.msra.mxu0 0.0
      %320 = vmatprep.subr.mxu0 0.0
      %321 = vmatpush1.msra.mxu0 0.0
      %322 = vmatprep.subr.mxu0 0.0
      %323 = vmatpush1.msra.mxu0 0.0
      %324 = vmatprep.subr.mxu0 0.0
      %325 = vmatpush1.msra.mxu0 0.0
      %326 = vmatprep.subr.mxu0 0.0
      %327 = vmatpush1.msra.mxu0 0.0
      %328 = vmatprep.subr.mxu0 0.0
      %329 = vmatpush1.msra.mxu0 0.0
      %330 = vmatprep.subr.mxu0 0.0
      %331 = vmatpush1.msra.mxu0 0.0
      %332 = vmatprep.mubr.f32.mxu0 0.0
      %333 = vmatmul.mubr.f32.gmra.mrb[0].mxu0 %v245
      %v334 = vpop.f32.mrb[0].mxu0
      %v335 = vadd.f32 0.0, %v334
      %v336 = vpop.f32.mrb[0].mxu0
      %v337 = vadd.f32 0.0, %v336
      %338 = vmatprep.mubr.f32.mxu0 0.0
      %339 = vmatmul.mubr.f32.gmra.mrb[0].mxu0 %v248
      %v340 = vpop.f32.mrb[0].mxu0
      %v341 = vadd.f32 0.0, %v340
      %v342 = vpop.f32.mrb[0].mxu0
      %v343 = vadd.f32 0.0, %v342
      %344 = vmatprep.mubr.f32.mxu0 0.0
      %345 = vmatmul.mubr.f32.gmra.mrb[0].mxu0 %v251
      %v346 = vpop.f32.mrb[0].mxu0
      %v347 = vadd.f32 0.0, %v346
      %v348 = vpop.f32.mrb[0].mxu0
      %v349 = vadd.f32 0.0, %v348
      %350 = vmatprep.mubr.f32.mxu0 0.0
      %351 = vmatmul.mubr.f32.gmra.mrb[0].mxu0 %v254
      %v352 = vpop.f32.mrb[0].mxu0
      %v353 = vadd.f32 0.0, %v352
      %v354 = vpop.f32.mrb[0].mxu0
      %v355 = vadd.f32 0.0, %v354
      %356 = vmatprep.mubr.f32.mxu0 0.0
      %357 = vmatmul.mubr.f32.gmra.mrb[0].mxu0 %v257
      %v358 = vpop.f32.mrb[0].mxu0
      %v359 = vadd.f32 0.0, %v358
      %v360 = vpop.f32.mrb[0].mxu0
      %v361 = vadd.f32 0.0, %v360
      %362 = vmatprep.mubr.f32.mxu0 0.0
      %363 = vmatmul.mubr.f32.gmra.mrb[0].mxu0 %v260
      %v364 = vpop.f32.mrb[0].mxu0
      %v365 = vadd.f32 0.0, %v364
      %v366 = vpop.f32.mrb[0].mxu0
      %v367 = vadd.f32 0.0, %v366
      %368 = vmatprep.mubr.f32.mxu0 0.0
      %369 = vmatmul.mubr.f32.gmra.mrb[0].mxu0 %v263
      %v370 = vpop.f32.mrb[0].mxu0
      %v371 = vadd.f32 0.0, %v370
      %v372 = vpop.f32.mrb[0].mxu0
      %v373 = vadd.f32 0.0, %v372
      %374 = vmatprep.mubr.f32.mxu0 0.0
      %375 = vmatmul.mubr.f32.gmra.mrb[0].mxu0 %v266
      %v376 = vpop.f32.mrb[0].mxu0
      %v377 = vadd.f32 0.0, %v376
      %v378 = vpop.f32.mrb[0].mxu0
      %v379 = vadd.f32 0.0, %v378
      %380 = vdwg.mxu0
      %381 = vmatprep.subr.mxu0 0.0
      %382 = vmatpush1.msra.mxu0 %v233
      %383 = vmatprep.subr.mxu0 0.0
      %384 = vmatpush1.msra.mxu0 %v236
      %385 = vmatprep.subr.mxu0 0.0
      %386 = vmatpush1.msra.mxu0 %v239
      %387 = vmatprep.subr.mxu0 0.0
      %388 = vmatpush1.msra.mxu0 %v242
      %389 = vmatprep.subr.mxu0 0.0
      %390 = vmatpush1.msra.mxu0 0.0
      %391 = vmatprep.subr.mxu0 0.0
      %392 = vmatpush1.msra.mxu0 0.0
      %393 = vmatprep.subr.mxu0 0.0
      %394 = vmatpush1.msra.mxu0 0.0
      %395 = vmatprep.subr.mxu0 0.0
      %396 = vmatpush1.msra.mxu0 0.0
      %397 = vmatprep.subr.mxu0 0.0
      %398 = vmatpush1.msra.mxu0 0.0
      %399 = vmatprep.subr.mxu0 0.0
      %400 = vmatpush1.msra.mxu0 0.0
      %401 = vmatprep.subr.mxu0 0.0
      %402 = vmatpush1.msra.mxu0 0.0
      %403 = vmatprep.subr.mxu0 0.0
      %404 = vmatpush1.msra.mxu0 0.0
      %405 = vmatprep.subr.mxu0 0.0
      %406 = vmatpush1.msra.mxu0 0.0
      %407 = vmatprep.subr.mxu0 0.0
      %408 = vmatpush1.msra.mxu0 0.0
      %409 = vmatprep.subr.mxu0 0.0
      %410 = vmatpush1.msra.mxu0 0.0
      %411 = vmatprep.subr.mxu0 0.0
      %412 = vmatpush1.msra.mxu0 0.0
      %413 = vmatprep.subr.mxu0 0.0
      %414 = vmatpush1.msra.mxu0 0.0
      %415 = vmatprep.subr.mxu0 0.0
      %416 = vmatpush1.msra.mxu0 0.0
      %417 = vmatprep.subr.mxu0 0.0
      %418 = vmatpush1.msra.mxu0 0.0
      %419 = vmatprep.subr.mxu0 0.0
      %420 = vmatpush1.msra.mxu0 0.0
      %421 = vmatprep.subr.mxu0 0.0
      %422 = vmatpush1.msra.mxu0 0.0
      %423 = vmatprep.subr.mxu0 0.0
      %424 = vmatpush1.msra.mxu0 0.0
      %425 = vmatprep.subr.mxu0 0.0
      %426 = vmatpush1.msra.mxu0 0.0
      %427 = vmatprep.subr.mxu0 0.0
      %428 = vmatpush1.msra.mxu0 0.0
      %429 = vmatprep.subr.mxu0 0.0
      %430 = vmatpush1.msra.mxu0 0.0
      %431 = vmatprep.subr.mxu0 0.0
      %432 = vmatpush1.msra.mxu0 0.0
      %433 = vmatprep.subr.mxu0 0.0
      %434 = vmatpush1.msra.mxu0 0.0
      %435 = vmatprep.subr.mxu0 0.0
      %436 = vmatpush1.msra.mxu0 0.0
      %437 = vmatprep.subr.mxu0 0.0
      %438 = vmatpush1.msra.mxu0 0.0
      %439 = vmatprep.subr.mxu0 0.0
      %440 = vmatpush1.msra.mxu0 0.0
      %441 = vmatprep.subr.mxu0 0.0
      %442 = vmatpush1.msra.mxu0 0.0
      %443 = vmatprep.subr.mxu0 0.0
      %444 = vmatpush1.msra.mxu0 0.0
      %445 = vmatprep.mubr.f32.mxu0 0.0
      %446 = vmatmul.mubr.f32.gmra.mrb[0].mxu0 %v245
      %v447 = vpop.f32.mrb[0].mxu0
      %v448 = vadd.f32 0.0, %v447
      %v449 = vpop.f32.mrb[0].mxu0
      %450 = vmatprep.mubr.f32.mxu0 0.0
      %451 = vmatmul.mubr.f32.gmra.mrb[0].mxu0 %v248
      %v452 = vpop.f32.mrb[0].mxu0
      %v453 = vadd.f32 0.0, %v452
      %v454 = vpop.f32.mrb[0].mxu0
      %455 = vmatprep.mubr.f32.mxu0 0.0
      %456 = vmatmul.mubr.f32.gmra.mrb[0].mxu0 %v251
      %v457 = vpop.f32.mrb[0].mxu0
      %v458 = vadd.f32 0.0, %v457
      %v459 = vpop.f32.mrb[0].mxu0
      %460 = vmatprep.mubr.f32.mxu0 0.0
      %461 = vmatmul.mubr.f32.gmra.mrb[0].mxu0 %v254
      %v462 = vpop.f32.mrb[0].mxu0
      %v463 = vadd.f32 0.0, %v462
      %v464 = vpop.f32.mrb[0].mxu0
      %465 = vmatprep.mubr.f32.mxu0 0.0
      %466 = vmatmul.mubr.f32.gmra.mrb[0].mxu0 %v257
      %v467 = vpop.f32.mrb[0].mxu0
      %v468 = vadd.f32 0.0, %v467
      %v469 = vpop.f32.mrb[0].mxu0
      %470 = vmatprep.mubr.f32.mxu0 0.0
      %471 = vmatmul.mubr.f32.gmra.mrb[0].mxu0 %v260
      %v472 = vpop.f32.mrb[0].mxu0
      %v473 = vadd.f32 0.0, %v472
      %v474 = vpop.f32.mrb[0].mxu0
      %475 = vmatprep.mubr.f32.mxu0 0.0
      %476 = vmatmul.mubr.f32.gmra.mrb[0].mxu0 %v263
      %v477 = vpop.f32.mrb[0].mxu0
      %v478 = vadd.f32 0.0, %v477
      %v479 = vpop.f32.mrb[0].mxu0
      %480 = vmatprep.mubr.f32.mxu0 0.0
      %481 = vmatmul.mubr.f32.gmra.mrb[0].mxu0 %v266
      %v482 = vpop.f32.mrb[0].mxu0
      %v483 = vadd.f32 0.0, %v482
      %v484 = vpop.f32.mrb[0].mxu0
      %485 = vdwg.mxu0
      %486 = vst [vmem:[#allocation2] sm:$0xff] %v335
      %487 = vst [vmem:[#allocation2 + $0x8] sm:$0xff] %v337
      %488 = vst [vmem:[#allocation2 + $0x10] sm:$0xff] %v448
      %489 = vst [vmem:[#allocation2 + $0x18] sm:$0xff] %v341
      %490 = vst [vmem:[#allocation2 + $0x20] sm:$0xff] %v343
      %491 = vst [vmem:[#allocation2 + $0x28] sm:$0xff] %v453
      %492 = vst [vmem:[#allocation2 + $0x30] sm:$0xff] %v347
      %493 = vst [vmem:[#allocation2 + $0x38] sm:$0xff] %v349
      %494 = vst [vmem:[#allocation2 + $0x40] sm:$0xff] %v458
      %495 = vst [vmem:[#allocation2 + $0x48] sm:$0xff] %v353
      %496 = vst [vmem:[#allocation2 + $0x50] sm:$0xff] %v355
      %497 = vst [vmem:[#allocation2 + $0x58] sm:$0xff] %v463
      %498 = vst [vmem:[#allocation2 + $0x60] sm:$0xff] %v359
      %499 = vst [vmem:[#allocation2 + $0x68] sm:$0xff] %v361
      %500 = vst [vmem:[#allocation2 + $0x70] sm:$0xff] %v468
      %501 = vst [vmem:[#allocation2 + $0x78] sm:$0xff] %v365
      %502 = vst [vmem:[#allocation2 + $0x80] sm:$0xff] %v367
      %503 = vst [vmem:[#allocation2 + $0x88] sm:$0xff] %v473
      %504 = vst [vmem:[#allocation2 + $0x90] sm:$0xff] %v371
      %505 = vst [vmem:[#allocation2 + $0x98] sm:$0xff] %v373
      %506 = vst [vmem:[#allocation2 + $0xa0] sm:$0xff] %v478
      %507 = vst [vmem:[#allocation2 + $0xa8] sm:$0xff] %v377
      %508 = vst [vmem:[#allocation2 + $0xb0] sm:$0xff] %v379
      %509 = vst [vmem:[#allocation2 + $0xb8] sm:$0xff] %v483
      %v510 = vld [vmem:[%s209] sm:$0xff]
      %v511 = vld [vmem:[%s209 + $0x8] sm:$0xff]
      %v512 = vld [vmem:[%s209 + $0x10] sm:$0xff]
      %v513 = vld [vmem:[%s209 + $0x18] sm:$0xff]
      %v514 = vld [vmem:[%s209 + $0x20] sm:$0xff]
      %v515 = vld [vmem:[%s209 + $0x28] sm:$0xff]
      %v516 = vld [vmem:[%s209 + $0x30] sm:$0xff]
      %v517 = vld [vmem:[%s209 + $0x38] sm:$0xff]
      %v518 = vld [vmem:[%s2] sm:$0xff]
      %v519 = vld [vmem:[%s2 + $0x8] sm:$0xff]
      %v520 = vld [vmem:[%s2 + $0x10] sm:$0xff]
      %v521 = vld [vmem:[%s2 + $0x18] sm:$0xff]
      %v522 = vld [vmem:[%s2 + $0x20] sm:$0xff]
      %v523 = vld [vmem:[%s2 + $0x28] sm:$0xff]
      %v524 = vld [vmem:[%s2 + $0x30] sm:$0xff]
      %v525 = vld [vmem:[%s2 + $0x38] sm:$0xff]
      %v526 = vld [vmem:[%s2 + $0x40] sm:$0xff]
      %v527 = vld [vmem:[%s2 + $0x48] sm:$0xff]
      %v528 = vld [vmem:[%s2 + $0x50] sm:$0xff]
      %v529 = vld [vmem:[%s2 + $0x58] sm:$0xff]
      %v530 = vld [vmem:[%s2 + $0x60] sm:$0xff]
      %v531 = vld [vmem:[%s2 + $0x68] sm:$0xff]
      %v532 = vld [vmem:[%s2 + $0x70] sm:$0xff]
      %v533 = vld [vmem:[%s2 + $0x78] sm:$0xff]
      %534 = vmatprep.subr.mxu0 0.0
      %535 = vmatpush1.msra.mxu0 %v518
      %536 = vmatprep.subr.mxu0 0.0
      %537 = vmatpush1.msra.mxu0 %v519
      %538 = vmatprep.subr.mxu0 0.0
      %539 = vmatpush1.msra.mxu0 %v520
      %540 = vmatprep.subr.mxu0 0.0
      %541 = vmatpush1.msra.mxu0 %v521
      %542 = vmatprep.subr.mxu0 0.0
      %543 = vmatpush1.msra.mxu0 %v522
      %544 = vmatprep.subr.mxu0 0.0
      %545 = vmatpush1.msra.mxu0 %v523
      %546 = vmatprep.subr.mxu0 0.0
      %547 = vmatpush1.msra.mxu0 %v524
      %548 = vmatprep.subr.mxu0 0.0
      %549 = vmatpush1.msra.mxu0 %v525
      %550 = vmatprep.subr.mxu0 0.0
      %551 = vmatpush1.msra.mxu0 %v526
      %552 = vmatprep.subr.mxu0 0.0
      %553 = vmatpush1.msra.mxu0 %v527
      %554 = vmatprep.subr.mxu0 0.0
      %555 = vmatpush1.msra.mxu0 %v528
      %556 = vmatprep.subr.mxu0 0.0
      %557 = vmatpush1.msra.mxu0 %v529
      %558 = vmatprep.subr.mxu0 0.0
      %559 = vmatpush1.msra.mxu0 %v530
      %560 = vmatprep.subr.mxu0 0.0
      %561 = vmatpush1.msra.mxu0 %v531
      %562 = vmatprep.subr.mxu0 0.0
      %563 = vmatpush1.msra.mxu0 %v532
      %564 = vmatprep.subr.mxu0 0.0
      %565 = vmatpush1.msra.mxu0 %v533
      %566 = vmatprep.subr.mxu0 0.0
      %567 = vmatpush1.msra.mxu0 0.0
      %568 = vmatprep.subr.mxu0 0.0
      %569 = vmatpush1.msra.mxu0 0.0
      %570 = vmatprep.subr.mxu0 0.0
      %571 = vmatpush1.msra.mxu0 0.0
      %572 = vmatprep.subr.mxu0 0.0
      %573 = vmatpush1.msra.mxu0 0.0
      %574 = vmatprep.subr.mxu0 0.0
      %575 = vmatpush1.msra.mxu0 0.0
      %576 = vmatprep.subr.mxu0 0.0
      %577 = vmatpush1.msra.mxu0 0.0
      %578 = vmatprep.subr.mxu0 0.0
      %579 = vmatpush1.msra.mxu0 0.0
      %580 = vmatprep.subr.mxu0 0.0
      %581 = vmatpush1.msra.mxu0 0.0
      %582 = vmatprep.subr.mxu0 0.0
      %583 = vmatpush1.msra.mxu0 0.0
      %584 = vmatprep.subr.mxu0 0.0
      %585 = vmatpush1.msra.mxu0 0.0
      %586 = vmatprep.subr.mxu0 0.0
      %587 = vmatpush1.msra.mxu0 0.0
      %588 = vmatprep.subr.mxu0 0.0
      %589 = vmatpush1.msra.mxu0 0.0
      %590 = vmatprep.subr.mxu0 0.0
      %591 = vmatpush1.msra.mxu0 0.0
      %592 = vmatprep.subr.mxu0 0.0
      %593 = vmatpush1.msra.mxu0 0.0
      %594 = vmatprep.subr.mxu0 0.0
      %595 = vmatpush1.msra.mxu0 0.0
      %596 = vmatprep.subr.mxu0 0.0
      %597 = vmatpush1.msra.mxu0 0.0
      %598 = vmatprep.mubr.f32.mxu0 0.0
      %599 = vmatmul.mubr.f32.gmra.mrb[0].mxu0 %v510
      %v600 = vpop.f32.mrb[0].mxu0
      %v601 = vadd.f32 0.0, %v600
      %v602 = vpop.f32.mrb[0].mxu0
      %603 = vmatprep.mubr.f32.mxu0 0.0
      %604 = vmatmul.mubr.f32.gmra.mrb[0].mxu0 %v511
      %v605 = vpop.f32.mrb[0].mxu0
      %v606 = vadd.f32 0.0, %v605
      %v607 = vpop.f32.mrb[0].mxu0
      %608 = vmatprep.mubr.f32.mxu0 0.0
      %609 = vmatmul.mubr.f32.gmra.mrb[0].mxu0 %v512
      %v610 = vpop.f32.mrb[0].mxu0
      %v611 = vadd.f32 0.0, %v610
      %v612 = vpop.f32.mrb[0].mxu0
      %613 = vmatprep.mubr.f32.mxu0 0.0
      %614 = vmatmul.mubr.f32.gmra.mrb[0].mxu0 %v513
      %v615 = vpop.f32.mrb[0].mxu0
      %v616 = vadd.f32 0.0, %v615
      %v617 = vpop.f32.mrb[0].mxu0
      %618 = vmatprep.mubr.f32.mxu0 0.0
      %619 = vmatmul.mubr.f32.gmra.mrb[0].mxu0 %v514
      %v620 = vpop.f32.mrb[0].mxu0
      %v621 = vadd.f32 0.0, %v620
      %v622 = vpop.f32.mrb[0].mxu0
      %623 = vmatprep.mubr.f32.mxu0 0.0
      %624 = vmatmul.mubr.f32.gmra.mrb[0].mxu0 %v515
      %v625 = vpop.f32.mrb[0].mxu0
      %v626 = vadd.f32 0.0, %v625
      %v627 = vpop.f32.mrb[0].mxu0
      %628 = vmatprep.mubr.f32.mxu0 0.0
      %629 = vmatmul.mubr.f32.gmra.mrb[0].mxu0 %v516
      %v630 = vpop.f32.mrb[0].mxu0
      %v631 = vadd.f32 0.0, %v630
      %v632 = vpop.f32.mrb[0].mxu0
      %633 = vmatprep.mubr.f32.mxu0 0.0
      %634 = vmatmul.mubr.f32.gmra.mrb[0].mxu0 %v517
      %v635 = vpop.f32.mrb[0].mxu0
      %v636 = vadd.f32 0.0, %v635
      %v637 = vpop.f32.mrb[0].mxu0
      %638 = vdwg.mxu0
      %vm639 = vcmp.eq.f32.partialorder %v601, 0.0
      %vm640 = vcmp.eq.f32.partialorder %v606, 0.0
      %vm641 = vcmp.eq.f32.partialorder %v611, 0.0
      %vm642 = vcmp.eq.f32.partialorder %v616, 0.0
      %vm643 = vcmp.eq.f32.partialorder %v621, 0.0
      %vm644 = vcmp.eq.f32.partialorder %v626, 0.0
      %vm645 = vcmp.eq.f32.partialorder %v631, 0.0
      %vm646 = vcmp.eq.f32.partialorder %v636, 0.0
      %v647 = vsel %vm639, 1.1920929e-07, %v601
      %v648 = vsel %vm640, 1.1920929e-07, %v606
      %v649 = vsel %vm641, 1.1920929e-07, %v611
      %v650 = vsel %vm642, 1.1920929e-07, %v616
      %v651 = vsel %vm643, 1.1920929e-07, %v621
      %v652 = vsel %vm644, 1.1920929e-07, %v626
      %v653 = vsel %vm645, 1.1920929e-07, %v631
      %v654 = vsel %vm646, 1.1920929e-07, %v636
      %v655 = vld [vmem:[#allocation2] sm:$0xff]
      %v656 = vld [vmem:[#allocation2 + $0x18] sm:$0xff]
      %v657 = vld [vmem:[#allocation2 + $0x30] sm:$0xff]
      %v658 = vld [vmem:[#allocation2 + $0x48] sm:$0xff]
      %v659 = vld [vmem:[#allocation2 + $0x60] sm:$0xff]
      %v660 = vld [vmem:[#allocation2 + $0x78] sm:$0xff]
      %v661 = vld [vmem:[#allocation2 + $0x90] sm:$0xff]
      %v662 = vld [vmem:[#allocation2 + $0xa8] sm:$0xff]
      %v663 = vrcp.pop %v647
      %v664 = vmul.f32 %v655, %v663
      %v665 = vrcp.pop %v648
      %v666 = vmul.f32 %v656, %v665
      %v667 = vrcp.pop %v649
      %v668 = vmul.f32 %v657, %v667
      %v669 = vrcp.pop %v650
      %v670 = vmul.f32 %v658, %v669
      %v671 = vrcp.pop %v651
      %v672 = vmul.f32 %v659, %v671
      %v673 = vrcp.pop %v652
      %v674 = vmul.f32 %v660, %v673
      %v675 = vrcp.pop %v653
      %v676 = vmul.f32 %v661, %v675
      %v677 = vrcp.pop %v654
      %v678 = vmul.f32 %v662, %v677
      %v679 = vmul.f32 %v664, %v510
      %v680 = vmul.f32 %v666, %v511
      %v681 = vmul.f32 %v668, %v512
      %v682 = vmul.f32 %v670, %v513
      %v683 = vmul.f32 %v672, %v514
      %v684 = vmul.f32 %v674, %v515
      %v685 = vmul.f32 %v676, %v516
      %v686 = vmul.f32 %v678, %v517
      %s687 = scalar_lea.vmem %s2, 128
      %v688 = vld [vmem:[%s687] sm:$0xff]
      %v689 = vld [vmem:[%s687 + $0x8] sm:$0xff]
      %v690 = vld [vmem:[%s687 + $0x10] sm:$0xff]
      %v691 = vld [vmem:[%s687 + $0x18] sm:$0xff]
      %v692 = vld [vmem:[%s687 + $0x20] sm:$0xff]
      %v693 = vld [vmem:[%s687 + $0x28] sm:$0xff]
      %v694 = vld [vmem:[%s687 + $0x30] sm:$0xff]
      %v695 = vld [vmem:[%s687 + $0x38] sm:$0xff]
      %v696 = vld [vmem:[%s687 + $0x40] sm:$0xff]
      %v697 = vld [vmem:[%s687 + $0x48] sm:$0xff]
      %v698 = vld [vmem:[%s687 + $0x50] sm:$0xff]
      %v699 = vld [vmem:[%s687 + $0x58] sm:$0xff]
      %v700 = vld [vmem:[%s687 + $0x60] sm:$0xff]
      %v701 = vld [vmem:[%s687 + $0x68] sm:$0xff]
      %v702 = vld [vmem:[%s687 + $0x70] sm:$0xff]
      %v703 = vld [vmem:[%s687 + $0x78] sm:$0xff]
      %704 = vmatprep.subr.mxu0 0.0
      %705 = vmatpush1.msra.mxu0 %v688
      %706 = vmatprep.subr.mxu0 0.0
      %707 = vmatpush1.msra.mxu0 %v689
      %708 = vmatprep.subr.mxu0 0.0
      %709 = vmatpush1.msra.mxu0 %v690
      %710 = vmatprep.subr.mxu0 0.0
      %711 = vmatpush1.msra.mxu0 %v691
      %712 = vmatprep.subr.mxu0 0.0
      %713 = vmatpush1.msra.mxu0 %v692
      %714 = vmatprep.subr.mxu0 0.0
      %715 = vmatpush1.msra.mxu0 %v693
      %716 = vmatprep.subr.mxu0 0.0
      %717 = vmatpush1.msra.mxu0 %v694
      %718 = vmatprep.subr.mxu0 0.0
      %719 = vmatpush1.msra.mxu0 %v695
      %720 = vmatprep.subr.mxu0 0.0
      %721 = vmatpush1.msra.mxu0 %v696
      %722 = vmatprep.subr.mxu0 0.0
      %723 = vmatpush1.msra.mxu0 %v697
      %724 = vmatprep.subr.mxu0 0.0
      %725 = vmatpush1.msra.mxu0 %v698
      %726 = vmatprep.subr.mxu0 0.0
      %727 = vmatpush1.msra.mxu0 %v699
      %728 = vmatprep.subr.mxu0 0.0
      %729 = vmatpush1.msra.mxu0 %v700
      %730 = vmatprep.subr.mxu0 0.0
      %731 = vmatpush1.msra.mxu0 %v701
      %732 = vmatprep.subr.mxu0 0.0
      %733 = vmatpush1.msra.mxu0 %v702
      %734 = vmatprep.subr.mxu0 0.0
      %735 = vmatpush1.msra.mxu0 %v703
      %736 = vmatprep.subr.mxu0 0.0
      %737 = vmatpush1.msra.mxu0 0.0
      %738 = vmatprep.subr.mxu0 0.0
      %739 = vmatpush1.msra.mxu0 0.0
      %740 = vmatprep.subr.mxu0 0.0
      %741 = vmatpush1.msra.mxu0 0.0
      %742 = vmatprep.subr.mxu0 0.0
      %743 = vmatpush1.msra.mxu0 0.0
      %744 = vmatprep.subr.mxu0 0.0
      %745 = vmatpush1.msra.mxu0 0.0
      %746 = vmatprep.subr.mxu0 0.0
      %747 = vmatpush1.msra.mxu0 0.0
      %748 = vmatprep.subr.mxu0 0.0
      %749 = vmatpush1.msra.mxu0 0.0
      %750 = vmatprep.subr.mxu0 0.0
      %751 = vmatpush1.msra.mxu0 0.0
      %752 = vmatprep.subr.mxu0 0.0
      %753 = vmatpush1.msra.mxu0 0.0
      %754 = vmatprep.subr.mxu0 0.0
      %755 = vmatpush1.msra.mxu0 0.0
      %756 = vmatprep.subr.mxu0 0.0
      %757 = vmatpush1.msra.mxu0 0.0
      %758 = vmatprep.subr.mxu0 0.0
      %759 = vmatpush1.msra.mxu0 0.0
      %760 = vmatprep.subr.mxu0 0.0
      %761 = vmatpush1.msra.mxu0 0.0
      %762 = vmatprep.subr.mxu0 0.0
      %763 = vmatpush1.msra.mxu0 0.0
      %764 = vmatprep.subr.mxu0 0.0
      %765 = vmatpush1.msra.mxu0 0.0
      %766 = vmatprep.subr.mxu0 0.0
      %767 = vmatpush1.msra.mxu0 0.0
      %768 = vmatprep.mubr.f32.mxu0 0.0
      %769 = vmatmul.mubr.f32.gmra.mrb[0].mxu0 %v679
      %v770 = vpop.f32.mrb[0].mxu0
      %v771 = vadd.f32 0.0, %v770
      %v772 = vpop.f32.mrb[0].mxu0
      %773 = vmatprep.mubr.f32.mxu0 0.0
      %774 = vmatmul.mubr.f32.gmra.mrb[0].mxu0 %v680
      %v775 = vpop.f32.mrb[0].mxu0
      %v776 = vadd.f32 0.0, %v775
      %v777 = vpop.f32.mrb[0].mxu0
      %778 = vmatprep.mubr.f32.mxu0 0.0
      %779 = vmatmul.mubr.f32.gmra.mrb[0].mxu0 %v681
      %v780 = vpop.f32.mrb[0].mxu0
      %v781 = vadd.f32 0.0, %v780
      %v782 = vpop.f32.mrb[0].mxu0
      %783 = vmatprep.mubr.f32.mxu0 0.0
      %784 = vmatmul.mubr.f32.gmra.mrb[0].mxu0 %v682
      %v785 = vpop.f32.mrb[0].mxu0
      %v786 = vadd.f32 0.0, %v785
      %v787 = vpop.f32.mrb[0].mxu0
      %788 = vmatprep.mubr.f32.mxu0 0.0
      %789 = vmatmul.mubr.f32.gmra.mrb[0].mxu0 %v683
      %v790 = vpop.f32.mrb[0].mxu0
      %v791 = vadd.f32 0.0, %v790
      %v792 = vpop.f32.mrb[0].mxu0
      %793 = vmatprep.mubr.f32.mxu0 0.0
      %794 = vmatmul.mubr.f32.gmra.mrb[0].mxu0 %v684
      %v795 = vpop.f32.mrb[0].mxu0
      %v796 = vadd.f32 0.0, %v795
      %v797 = vpop.f32.mrb[0].mxu0
      %798 = vmatprep.mubr.f32.mxu0 0.0
      %799 = vmatmul.mubr.f32.gmra.mrb[0].mxu0 %v685
      %v800 = vpop.f32.mrb[0].mxu0
      %v801 = vadd.f32 0.0, %v800
      %v802 = vpop.f32.mrb[0].mxu0
      %803 = vmatprep.mubr.f32.mxu0 0.0
      %804 = vmatmul.mubr.f32.gmra.mrb[0].mxu0 %v686
      %v805 = vpop.f32.mrb[0].mxu0
      %v806 = vadd.f32 0.0, %v805
      %v807 = vpop.f32.mrb[0].mxu0
      %808 = vdwg.mxu0
      %vm809 = vcmp.eq.f32.partialorder %v771, 0.0
      %vm810 = vcmp.eq.f32.partialorder %v776, 0.0
      %vm811 = vcmp.eq.f32.partialorder %v781, 0.0
      %vm812 = vcmp.eq.f32.partialorder %v786, 0.0
      %vm813 = vcmp.eq.f32.partialorder %v791, 0.0
      %vm814 = vcmp.eq.f32.partialorder %v796, 0.0
      %vm815 = vcmp.eq.f32.partialorder %v801, 0.0
      %vm816 = vcmp.eq.f32.partialorder %v806, 0.0
      %v817 = vsel %vm809, 1.1920929e-07, %v771
      %v818 = vsel %vm810, 1.1920929e-07, %v776
      %v819 = vsel %vm811, 1.1920929e-07, %v781
      %v820 = vsel %vm812, 1.1920929e-07, %v786
      %v821 = vsel %vm813, 1.1920929e-07, %v791
      %v822 = vsel %vm814, 1.1920929e-07, %v796
      %v823 = vsel %vm815, 1.1920929e-07, %v801
      %v824 = vsel %vm816, 1.1920929e-07, %v806
      %v825 = vld [vmem:[#allocation2 + $0x8] sm:$0xff]
      %v826 = vld [vmem:[#allocation2 + $0x20] sm:$0xff]
      %v827 = vld [vmem:[#allocation2 + $0x38] sm:$0xff]
      %v828 = vld [vmem:[#allocation2 + $0x50] sm:$0xff]
      %v829 = vld [vmem:[#allocation2 + $0x68] sm:$0xff]
      %v830 = vld [vmem:[#allocation2 + $0x80] sm:$0xff]
      %v831 = vld [vmem:[#allocation2 + $0x98] sm:$0xff]
      %v832 = vld [vmem:[#allocation2 + $0xb0] sm:$0xff]
      %v833 = vrcp.pop %v817
      %v834 = vmul.f32 %v825, %v833
      %v835 = vrcp.pop %v818
      %v836 = vmul.f32 %v826, %v835
      %v837 = vrcp.pop %v819
      %v838 = vmul.f32 %v827, %v837
      %v839 = vrcp.pop %v820
      %v840 = vmul.f32 %v828, %v839
      %v841 = vrcp.pop %v821
      %v842 = vmul.f32 %v829, %v841
      %v843 = vrcp.pop %v822
      %v844 = vmul.f32 %v830, %v843
      %v845 = vrcp.pop %v823
      %v846 = vmul.f32 %v831, %v845
      %v847 = vrcp.pop %v824
      %v848 = vmul.f32 %v832, %v847
      %v849 = vmul.f32 %v834, %v679
      %v850 = vmul.f32 %v836, %v680
      %v851 = vmul.f32 %v838, %v681
      %v852 = vmul.f32 %v840, %v682
      %v853 = vmul.f32 %v842, %v683
      %v854 = vmul.f32 %v844, %v684
      %v855 = vmul.f32 %v846, %v685
      %v856 = vmul.f32 %v848, %v686
      %s857 = scalar_lea.vmem %s2, 256
      %v858 = vld [vmem:[%s857] sm:$0xff]
      %v859 = vld [vmem:[%s857 + $0x8] sm:$0xff]
      %v860 = vld [vmem:[%s857 + $0x10] sm:$0xff]
      %v861 = vld [vmem:[%s857 + $0x18] sm:$0xff]
      %v862 = vld [vmem:[%s857 + $0x20] sm:$0xff]
      %v863 = vld [vmem:[%s857 + $0x28] sm:$0xff]
      %v864 = vld [vmem:[%s857 + $0x30] sm:$0xff]
      %v865 = vld [vmem:[%s857 + $0x38] sm:$0xff]
      %v866 = vld [vmem:[%s857 + $0x40] sm:$0xff]
      %v867 = vld [vmem:[%s857 + $0x48] sm:$0xff]
      %v868 = vld [vmem:[%s857 + $0x50] sm:$0xff]
      %v869 = vld [vmem:[%s857 + $0x58] sm:$0xff]
      %v870 = vld [vmem:[%s857 + $0x60] sm:$0xff]
      %v871 = vld [vmem:[%s857 + $0x68] sm:$0xff]
      %v872 = vld [vmem:[%s857 + $0x70] sm:$0xff]
      %v873 = vld [vmem:[%s857 + $0x78] sm:$0xff]
      %874 = vmatprep.subr.mxu0 0.0
      %875 = vmatpush1.msra.mxu0 %v858
      %876 = vmatprep.subr.mxu0 0.0
      %877 = vmatpush1.msra.mxu0 %v859
      %878 = vmatprep.subr.mxu0 0.0
      %879 = vmatpush1.msra.mxu0 %v860
      %880 = vmatprep.subr.mxu0 0.0
      %881 = vmatpush1.msra.mxu0 %v861
      %882 = vmatprep.subr.mxu0 0.0
      %883 = vmatpush1.msra.mxu0 %v862
      %884 = vmatprep.subr.mxu0 0.0
      %885 = vmatpush1.msra.mxu0 %v863
      %886 = vmatprep.subr.mxu0 0.0
      %887 = vmatpush1.msra.mxu0 %v864
      %888 = vmatprep.subr.mxu0 0.0
      %889 = vmatpush1.msra.mxu0 %v865
      %890 = vmatprep.subr.mxu0 0.0
      %891 = vmatpush1.msra.mxu0 %v866
      %892 = vmatprep.subr.mxu0 0.0
      %893 = vmatpush1.msra.mxu0 %v867
      %894 = vmatprep.subr.mxu0 0.0
      %895 = vmatpush1.msra.mxu0 %v868
      %896 = vmatprep.subr.mxu0 0.0
      %897 = vmatpush1.msra.mxu0 %v869
      %898 = vmatprep.subr.mxu0 0.0
      %899 = vmatpush1.msra.mxu0 %v870
      %900 = vmatprep.subr.mxu0 0.0
      %901 = vmatpush1.msra.mxu0 %v871
      %902 = vmatprep.subr.mxu0 0.0
      %903 = vmatpush1.msra.mxu0 %v872
      %904 = vmatprep.subr.mxu0 0.0
      %905 = vmatpush1.msra.mxu0 %v873
      %906 = vmatprep.subr.mxu0 0.0
      %907 = vmatpush1.msra.mxu0 0.0
      %908 = vmatprep.subr.mxu0 0.0
      %909 = vmatpush1.msra.mxu0 0.0
      %910 = vmatprep.subr.mxu0 0.0
      %911 = vmatpush1.msra.mxu0 0.0
      %912 = vmatprep.subr.mxu0 0.0
      %913 = vmatpush1.msra.mxu0 0.0
      %914 = vmatprep.subr.mxu0 0.0
      %915 = vmatpush1.msra.mxu0 0.0
      %916 = vmatprep.subr.mxu0 0.0
      %917 = vmatpush1.msra.mxu0 0.0
      %918 = vmatprep.subr.mxu0 0.0
      %919 = vmatpush1.msra.mxu0 0.0
      %920 = vmatprep.subr.mxu0 0.0
      %921 = vmatpush1.msra.mxu0 0.0
      %922 = vmatprep.subr.mxu0 0.0
      %923 = vmatpush1.msra.mxu0 0.0
      %924 = vmatprep.subr.mxu0 0.0
      %925 = vmatpush1.msra.mxu0 0.0
      %926 = vmatprep.subr.mxu0 0.0
      %927 = vmatpush1.msra.mxu0 0.0
      %928 = vmatprep.subr.mxu0 0.0
      %929 = vmatpush1.msra.mxu0 0.0
      %930 = vmatprep.subr.mxu0 0.0
      %931 = vmatpush1.msra.mxu0 0.0
      %932 = vmatprep.subr.mxu0 0.0
      %933 = vmatpush1.msra.mxu0 0.0
      %934 = vmatprep.subr.mxu0 0.0
      %935 = vmatpush1.msra.mxu0 0.0
      %936 = vmatprep.subr.mxu0 0.0
      %937 = vmatpush1.msra.mxu0 0.0
      %938 = vmatprep.mubr.f32.mxu0 0.0
      %939 = vmatmul.mubr.f32.gmra.mrb[0].mxu0 %v849
      %v940 = vpop.f32.mrb[0].mxu0
      %v941 = vadd.f32 0.0, %v940
      %v942 = vpop.f32.mrb[0].mxu0
      %943 = vmatprep.mubr.f32.mxu0 0.0
      %944 = vmatmul.mubr.f32.gmra.mrb[0].mxu0 %v850
      %v945 = vpop.f32.mrb[0].mxu0
      %v946 = vadd.f32 0.0, %v945
      %v947 = vpop.f32.mrb[0].mxu0
      %948 = vmatprep.mubr.f32.mxu0 0.0
      %949 = vmatmul.mubr.f32.gmra.mrb[0].mxu0 %v851
      %v950 = vpop.f32.mrb[0].mxu0
      %v951 = vadd.f32 0.0, %v950
      %v952 = vpop.f32.mrb[0].mxu0
      %953 = vmatprep.mubr.f32.mxu0 0.0
      %954 = vmatmul.mubr.f32.gmra.mrb[0].mxu0 %v852
      %v955 = vpop.f32.mrb[0].mxu0
      %v956 = vadd.f32 0.0, %v955
      %v957 = vpop.f32.mrb[0].mxu0
      %958 = vmatprep.mubr.f32.mxu0 0.0
      %959 = vmatmul.mubr.f32.gmra.mrb[0].mxu0 %v853
      %v960 = vpop.f32.mrb[0].mxu0
      %v961 = vadd.f32 0.0, %v960
      %v962 = vpop.f32.mrb[0].mxu0
      %963 = vmatprep.mubr.f32.mxu0 0.0
      %964 = vmatmul.mubr.f32.gmra.mrb[0].mxu0 %v854
      %v965 = vpop.f32.mrb[0].mxu0
      %v966 = vadd.f32 0.0, %v965
      %v967 = vpop.f32.mrb[0].mxu0
      %968 = vmatprep.mubr.f32.mxu0 0.0
      %969 = vmatmul.mubr.f32.gmra.mrb[0].mxu0 %v855
      %v970 = vpop.f32.mrb[0].mxu0
      %v971 = vadd.f32 0.0, %v970
      %v972 = vpop.f32.mrb[0].mxu0
      %973 = vmatprep.mubr.f32.mxu0 0.0
      %974 = vmatmul.mubr.f32.gmra.mrb[0].mxu0 %v856
      %v975 = vpop.f32.mrb[0].mxu0
      %v976 = vadd.f32 0.0, %v975
      %v977 = vpop.f32.mrb[0].mxu0
      %978 = vdwg.mxu0
      %vm979 = vcmp.eq.f32.partialorder %v941, 0.0
      %vm980 = vcmp.eq.f32.partialorder %v946, 0.0
      %vm981 = vcmp.eq.f32.partialorder %v951, 0.0
      %vm982 = vcmp.eq.f32.partialorder %v956, 0.0
      %vm983 = vcmp.eq.f32.partialorder %v961, 0.0
      %vm984 = vcmp.eq.f32.partialorder %v966, 0.0
      %vm985 = vcmp.eq.f32.partialorder %v971, 0.0
      %vm986 = vcmp.eq.f32.partialorder %v976, 0.0
      %v987 = vsel %vm979, 1.1920929e-07, %v941
      %v988 = vsel %vm980, 1.1920929e-07, %v946
      %v989 = vsel %vm981, 1.1920929e-07, %v951
      %v990 = vsel %vm982, 1.1920929e-07, %v956
      %v991 = vsel %vm983, 1.1920929e-07, %v961
      %v992 = vsel %vm984, 1.1920929e-07, %v966
      %v993 = vsel %vm985, 1.1920929e-07, %v971
      %v994 = vsel %vm986, 1.1920929e-07, %v976
      %v995 = vld [vmem:[#allocation2 + $0x10] sm:$0xff]
      %v996 = vld [vmem:[#allocation2 + $0x28] sm:$0xff]
      %v997 = vld [vmem:[#allocation2 + $0x40] sm:$0xff]
      %v998 = vld [vmem:[#allocation2 + $0x58] sm:$0xff]
      %v999 = vld [vmem:[#allocation2 + $0x70] sm:$0xff]
      %v1000 = vld [vmem:[#allocation2 + $0x88] sm:$0xff]
      %v1001 = vld [vmem:[#allocation2 + $0xa0] sm:$0xff]
      %v1002 = vld [vmem:[#allocation2 + $0xb8] sm:$0xff]
      %v1003 = vrcp.pop %v987
      %v1004 = vmul.f32 %v995, %v1003
      %v1005 = vrcp.pop %v988
      %v1006 = vmul.f32 %v996, %v1005
      %v1007 = vrcp.pop %v989
      %v1008 = vmul.f32 %v997, %v1007
      %v1009 = vrcp.pop %v990
      %v1010 = vmul.f32 %v998, %v1009
      %v1011 = vrcp.pop %v991
      %v1012 = vmul.f32 %v999, %v1011
      %v1013 = vrcp.pop %v992
      %v1014 = vmul.f32 %v1000, %v1013
      %v1015 = vrcp.pop %v993
      %v1016 = vmul.f32 %v1001, %v1015
      %v1017 = vrcp.pop %v994
      %v1018 = vmul.f32 %v1002, %v1017
      %v1019 = vmul.f32 %v1004, %v849
      %v1020 = vmul.f32 %v1006, %v850
      %v1021 = vmul.f32 %v1008, %v851
      %v1022 = vmul.f32 %v1010, %v852
      %v1023 = vmul.f32 %v1012, %v853
      %v1024 = vmul.f32 %v1014, %v854
      %v1025 = vmul.f32 %v1016, %v855
      %v1026 = vmul.f32 %v1018, %v856
      %1027 = vst [vmem:[%s221] sm:$0xff] %v1019
      %1028 = vst [vmem:[%s221 + $0x8] sm:$0xff] %v1020
      %1029 = vst [vmem:[%s221 + $0x10] sm:$0xff] %v1021
      %1030 = vst [vmem:[%s221 + $0x18] sm:$0xff] %v1022
      %1031 = vst [vmem:[%s221 + $0x20] sm:$0xff] %v1023
      %1032 = vst [vmem:[%s221 + $0x28] sm:$0xff] %v1024
      %1033 = vst [vmem:[%s221 + $0x30] sm:$0xff] %v1025
      %1034 = vst [vmem:[%s221 + $0x38] sm:$0xff] %v1026
      %s1035 = smul.u32 8, %s15
      %p1036 = scmp.lt.s32.totalorder %s1035, 15
      %s1037 = scalar_select %p1036, %s1035, 15
      %s1038 = smul.addr %s1037, 8
      %s1039 = scalar_lea.vmem %s4, %s1038
      // Predicated region
      $region37: #{multi_fr_dnmf.1} parent=35 // pred_check
        %p1040 = pneg %p127
      $region38: #{multi_fr_dnmf.1} parent=35 // pred_check_branch
        %1042 = sbr.rel (%p1040) target = $region40
      $region39: #{multi_fr_dnmf.1} parent=35 // pred_region
        %s1043 = smul.u32 8, %s15
      $region40: #{multi_fr_dnmf.1} parent=35 // pred_fallthru
        _
    $region36: #{multi_fr_dnmf.1} parent=5 // pred_fallthru
      _
    %p1044 = scmp.le.s32.totalorder 2, %s10
    // Predicated region
    $region41: #{multi_fr_dnmf.1} parent=5 // pred_check
      %p1045 = pneg %p1044
    $region42: #{multi_fr_dnmf.1} parent=5 // pred_check_branch
      %1047 = sbr.rel (%p1045) target = $region44
    $region43: #{multi_fr_dnmf.1} parent=5 // pred_region
      %s1048 = ssub.s32 %s10, 2
      // Predicated region
      $region45: #{multi_fr_dnmf.1} parent=43 // pred_check
        %p1049 = pneg %p133
      $region46: #{multi_fr_dnmf.1} parent=43 // pred_check_branch
        %1051 = sbr.rel (%p1049) target = $region48
      $region47: #{multi_fr_dnmf.1} parent=43 // pred_region
        %s1052 = smul.u32 8, %s16
        %p1053 = scmp.lt.s32.totalorder %s1052, 15
        %s1054 = scalar_select %p1053, %s1052, 15
        %s1055 = smul.addr %s1054, 8
        %s1056 = scalar_lea.vmem %s4, %s1055
      $region48: #{multi_fr_dnmf.1} parent=43 // pred_fallthru
        _
    $region44: #{multi_fr_dnmf.1} parent=5 // pred_fallthru
      _
  $region6: #{multi_fr_dnmf.1} parent=0 // loop_footer
    %s14 = sadd.s32 1, %s10
  $region7: #{multi_fr_dnmf.1} parent=0 // loop_footer_branch
    %9 = sbr.rel target = $region3
  $region8: #{multi_fr_dnmf.1} parent=0 // loop_exit
    _

</llo_original>
